<compile_context>
chip_gen: v6e
topology: v6e:2x2x1
jax: 0.10.0
libtpu: 0.0.40
codegen_flags: <defaults>
</compile_context>

<pallas_src>
import functools

import jax
import jax.numpy as jnp
from jax.experimental import pallas as pl
from jax.experimental.pallas import tpu as pltpu

EPS = 1e-7
_LANES = 128
_TARGET_BLOCK_ELEMS = 4096 * 128   # ~2 MiB f32 per input per pipeline buffer
_MAX_COLS = 32 * 1024              # cap for the fallback (non-%128) column extent


@functools.lru_cache(maxsize=None)
def _num_tensorcores():
    """Best-effort count of TensorCores a single kernel can span via the
    "parallel" grid-dimension semantics (v7x dual-TC / megacore parts)."""
    try:
        info = pltpu.get_tpu_info()
        for name in ("num_cores", "core_count", "num_tensorcores",
                     "tensorcores_per_chip", "cores_per_chip"):
            val = getattr(info, name, None)
            if isinstance(val, int) and val > 0:
                return val
    except Exception:
        pass
    try:
        val = getattr(jax.devices()[0], "num_cores", None)
        if isinstance(val, int) and val > 0:
            return val
    except Exception:
        pass
    return 1


def _lane_view(shape, total):
    """A copy-free 2-D (rows, cols) streaming view of a contiguous array.

    Prefers cols == 128 (fully lane-aligned, contiguous blocks).  When numel
    is not a multiple of 128, uses the largest trailing-dims product in a
    sane range: the block's last dim then equals the full array dim (allowed
    by Mosaic), DMA stays contiguous, and no bulk HBM copy is materialized.
    Returns None if no such factorization exists.
    """
    if total % _LANES == 0:
        return total // _LANES, _LANES
    best = None
    suffix = 1
    for dim in reversed(shape[1:]):          # keep >= 1 leading dim as rows
        suffix *= int(dim)
        if _LANES <= suffix <= _MAX_COLS:
            best = suffix
    if best is None:
        return None
    return total // best, best


def _jaccard_kernel(pr_ref, gt_ref, out_ref, acc_ref, *,
                    rows, inner, num_blocks, ragged, has_dup):
    block_rows, _ = pr_ref.shape
    j = pl.program_id(1)                     # reduction over row-blocks

    @pl.when(j == 0)
    def _():
        acc_ref[...] = jnp.zeros_like(acc_ref)

    def fold(x):
        # (block_rows, cols) -> (8, cols): split the sublane axis into groups
        # of 8 rows and add the slabs vreg-wise.  The split is along the
        # already-8-tiled sublane axis, so it lowers to pure VPU adds with no
        # relayout / XLU work in the steady state.
        return jnp.sum(x.reshape(block_rows // 8, 8, x.shape[-1]), axis=0)

    def accumulate(mask=None):
        pr = pr_ref[...].astype(jnp.float32)   # activation=None -> identity
        gt = gt_ref[...].astype(jnp.float32)
        if mask is not None:
            # Mask BEFORE the multiply: rows past the logical end of a ragged
            # last block contain undefined (pipeline-padded) data.
            pr = jnp.where(mask, pr, 0.0)
            gt = jnp.where(mask, gt, 0.0)
        acc_ref[0] += fold(pr * gt)   # intersection partials
        acc_ref[1] += fold(pr)        # sum(pr) partials
        acc_ref[2] += fold(gt)        # sum(gt) partials

    if not (ragged or has_dup):
        # Fast path: every block is full and real -> no per-block mask work.
        accumulate()
    else:
        gb = pl.program_id(0) * inner + j    # unclamped global block index
        last = num_blocks - 1

        fast = (gb != last) if ragged else (gb < num_blocks)
        if ragged and has_dup:
            fast = jnp.logical_and(fast, gb < num_blocks)

        @pl.when(fast)
        def _():
            accumulate()

        if ragged:
            @pl.when(gb == last)
            def _():
                valid = rows - last * block_rows    # static, 0 < valid < block_rows
                row_ids = jax.lax.broadcasted_iota(jnp.int32, pr_ref.shape, 0)
                accumulate(mask=row_ids < valid)
        # Duplicate (clamped) blocks (gb >= num_blocks) fall through both
        # pl.when's: their DMA is in-bounds but they contribute nothing.

    @pl.when(j == pl.num_programs(1) - 1)
    def _():
        out_ref[0] = acc_ref[...]


def _pallas_sums(pr2, gt2):
    rows, cols = pr2.shape

    max_rows = max(8, (_TARGET_BLOCK_ELEMS // cols) // 8 * 8)
    block_rows = min(max_rows, (rows // 8) * 8)
    num_blocks = pl.cdiv(rows, block_rows)

    # 2-way megacore split only where a second TensorCore exists; on
    # single-TC chips it would only add a redundant clamped block DMA and
    # turn on masking for evenly divisible shapes.
    nsplit = 2 if (num_blocks >= 2 and _num_tensorcores() >= 2) else 1
    inner = pl.cdiv(num_blocks, nsplit)
    has_dup = nsplit * inner != num_blocks          # odd block count, 2 splits
    ragged = num_blocks * block_rows != rows        # last block partially valid

    def in_map(s, j):
        gb = s * inner + j
        if has_dup:
            gb = jnp.minimum(gb, num_blocks - 1)    # keep the DMA in bounds
        return (gb, 0)

    kernel = functools.partial(
        _jaccard_kernel, rows=rows, inner=inner, num_blocks=num_blocks,
        ragged=ragged, has_dup=has_dup)

    partial = pl.pallas_call(
        kernel,
        out_shape=jax.ShapeDtypeStruct((nsplit, 3, 8, cols), jnp.float32),
        grid_spec=pltpu.PrefetchScalarGridSpec(
            num_scalar_prefetch=0,
            grid=(nsplit, inner),
            in_specs=[pl.BlockSpec((block_rows, cols), in_map),
                      pl.BlockSpec((block_rows, cols), in_map)],
            out_specs=pl.BlockSpec((1, 3, 8, cols), lambda s, j: (s, 0, 0, 0)),
            scratch_shapes=[pltpu.VMEM((3, 8, cols), jnp.float32)],
        ),
        compiler_params=pltpu.CompilerParams(
            dimension_semantics=("parallel", "arbitrary")),
    )(pr2, gt2)

    # TODO(synk): fold this epilogue reduction into the kernel's last step
    # (SMEM scalar output) once vector->scalar SMEM stores are validated on
    # all target generations; under jit it fuses and is tiny either way.
    sums = jnp.sum(partial, axis=(0, 2, 3))
    return sums[0], sums[1], sums[2]


def _reduce_sums(pr2, gt2):
    """(intersection, sum_pr, sum_gt) over a 2-D lane-dense view."""
    rows, _ = pr2.shape
    if rows < 8:
        # Below sublane tiling / not worth a kernel launch.
        pr = pr2.astype(jnp.float32)
        gt = gt2.astype(jnp.float32)
        return jnp.sum(pr * gt), jnp.sum(pr), jnp.sum(gt)
    return _pallas_sums(pr2, gt2)


def jaccard_loss(y_pr, y_gt, eps=EPS):
    """Pallas implementation of JaccardLoss.forward (module defaults)."""
    assert y_pr.shape == y_gt.shape, "prediction / target shape mismatch"
    total = int(y_pr.size)
    if total == 0:
        return jnp.float32(0.0)              # 1 - eps/eps

    # TODO(synk): if y_pr comes from an immediately preceding elementwise
    # producer (e.g. sigmoid), experiment with
    # pltpu.CompilerParams(allow_input_fusion=...) to avoid materializing it.
    view = _lane_view(y_pr.shape, total)
    if view is not None:
        rows, cols = view
        inter, s_pr, s_gt = _reduce_sums(y_pr.reshape(rows, cols),
                                         y_gt.reshape(rows, cols))
    else:
        # TODO(synk): no copy-free lane-dense factorization of this shape; the
        # bulk slice below costs one extra HBM read+write of each input.
        pr_f = y_pr.reshape(-1)
        gt_f = y_gt.reshape(-1)
        bulk = (total // _LANES) * _LANES
        inter = s_pr = s_gt = jnp.float32(0.0)
        if bulk:
            inter, s_pr, s_gt = _reduce_sums(pr_f[:bulk].reshape(-1, _LANES),
                                             gt_f[:bulk].reshape(-1, _LANES))
        if bulk < total:
            tp = pr_f[bulk:].astype(jnp.float32)
            tg = gt_f[bulk:].astype(jnp.float32)
            inter = inter + jnp.sum(tp * tg)
            s_pr = s_pr + jnp.sum(tp)
            s_gt = s_gt + jnp.sum(tg)

    union = s_pr + s_gt - inter + eps
    return 1.0 - (inter + eps) / union


def _jaccard_loss_ref(y_pr, y_gt, eps=EPS):
    pr = y_pr.astype(jnp.float32)
    gt = y_gt.astype(jnp.float32)
    inter = jnp.sum(pr * gt)
    union = jnp.sum(pr) + jnp.sum(gt) - inter + eps
    return 1.0 - (inter + eps) / union


if __name__ == "__main__":
    key = jax.random.PRNGKey(0)
    k1, k2 = jax.random.split(key)

    # NCHW inputs, matching the PyTorch module's expectation.
    B, C, H, W = 2, 4, 16, 16
    y_pr = jax.nn.sigmoid(jax.random.normal(k1, (B, C, H, W), jnp.float32))
    y_gt = (jax.random.uniform(k2, (B, C, H, W)) > 0.5).astype(jnp.float32)

    loss_fn = jax.jit(jaccard_loss)
    loss = jax.block_until_ready(loss_fn(y_pr, y_gt))
    ref = _jaccard_loss_ref(y_pr, y_gt)
    assert jnp.allclose(loss, ref, rtol=1e-5, atol=1e-6), (loss, ref)

    # TODO(synk): per_image / class_weights / ignore_channels / threshold
    # non-default options of the PyTorch module are not implemented (module
    # defaults give the plain global Jaccard reduction computed here).
    print("KERNEL_OK")
</pallas_src>

<mosaic_0001>
module attributes {stable_mosaic.version = 11 : i64} {
  func.func @_jaccard_kernel(%arg0: i32, %arg1: i32, %arg2: memref<16x128xf32, #tpu.memory_space<vmem>>, %arg3: memref<16x128xf32, #tpu.memory_space<vmem>>, %arg4: memref<1x3x8x128xf32, #tpu.memory_space<vmem>>, %arg5: memref<3x8x128xf32, #tpu.memory_space<vmem>>) attributes {dimension_semantics = [#tpu.dimension_semantics<parallel>, #tpu.dimension_semantics<arbitrary>], iteration_bounds = array<i64: 1, 1>, scalar_prefetch = 0 : i64, scratch_operands = 1 : i64, tpu.core_type = #tpu.core_type<tc>, window_params = [{transform_indices = @transform_0, window_bounds = array<i64: 16, 128>}, {transform_indices = @transform_1, window_bounds = array<i64: 16, 128>}, {transform_indices = @transform_2, window_bounds = array<i64: 1, 3, 8, 128>}]} {
    %c0_i32 = arith.constant 0 : i32
    %0 = arith.cmpi eq, %arg1, %c0_i32 : i32
    %1 = arith.extui %0 : i1 to i32
    %c0_i32_0 = arith.constant 0 : i32
    %2 = arith.cmpi ne, %1, %c0_i32_0 : i32
    scf.if %2 {
      %cst_24 = arith.constant 0.000000e+00 : f32
      %33 = vector.broadcast %cst_24 : f32 to vector<3x8x128xf32>
      %c0_25 = arith.constant 0 : index
      %c0_26 = arith.constant 0 : index
      %c0_27 = arith.constant 0 : index
      %34 = vector.load %arg5[%c0_25, %c0_26, %c0_27] : memref<3x8x128xf32, #tpu.memory_space<vmem>>, vector<3x8x128xf32>
      tpu.vector_store %arg5[%c0_25, %c0_26, %c0_27], %33 {strides = array<i32>} : memref<3x8x128xf32, #tpu.memory_space<vmem>>, vector<3x8x128xf32>,
    } else {
    }
    %c0 = arith.constant 0 : index
    %c0_1 = arith.constant 0 : index
    %3 = vector.load %arg2[%c0, %c0_1] : memref<16x128xf32, #tpu.memory_space<vmem>>, vector<16x128xf32>
    %c0_2 = arith.constant 0 : index
    %c0_3 = arith.constant 0 : index
    %4 = vector.load %arg3[%c0_2, %c0_3] : memref<16x128xf32, #tpu.memory_space<vmem>>, vector<16x128xf32>
    %c0_4 = arith.constant 0 : index
    %c0_5 = arith.constant 0 : index
    %c0_6 = arith.constant 0 : index
    %5 = vector.load %arg5[%c0_4, %c0_5, %c0_6] : memref<3x8x128xf32, #tpu.memory_space<vmem>>, vector<1x8x128xf32>
    %6 = vector.shape_cast %5 : vector<1x8x128xf32> to vector<8x128xf32>
    %7 = arith.mulf %3, %4 : vector<16x128xf32>
    %8 = vector.shape_cast %7 : vector<16x128xf32> to vector<2x8x128xf32>
    %cst = arith.constant dense<0.000000e+00> : vector<8x128xf32>
    %9 = vector.multi_reduction <add>, %8, %cst [0] : vector<2x8x128xf32> to vector<8x128xf32>
    %10 = arith.addf %6, %9 : vector<8x128xf32>
    %c0_7 = arith.constant 0 : index
    %c0_8 = arith.constant 0 : index
    %c0_9 = arith.constant 0 : index
    %11 = vector.load %arg5[%c0_7, %c0_8, %c0_9] : memref<3x8x128xf32, #tpu.memory_space<vmem>>, vector<1x8x128xf32>
    %12 = vector.shape_cast %11 : vector<1x8x128xf32> to vector<8x128xf32>
    %13 = vector.shape_cast %10 : vector<8x128xf32> to vector<1x8x128xf32>
    tpu.vector_store %arg5[%c0_7, %c0_8, %c0_9], %13 {strides = array<i32>} : memref<3x8x128xf32, #tpu.memory_space<vmem>>, vector<1x8x128xf32>,
    %c1 = arith.constant 1 : index
    %c0_10 = arith.constant 0 : index
    %c0_11 = arith.constant 0 : index
    %14 = vector.load %arg5[%c1, %c0_10, %c0_11] : memref<3x8x128xf32, #tpu.memory_space<vmem>>, vector<1x8x128xf32>
    %15 = vector.shape_cast %14 : vector<1x8x128xf32> to vector<8x128xf32>
    %16 = vector.shape_cast %3 : vector<16x128xf32> to vector<2x8x128xf32>
    %cst_12 = arith.constant dense<0.000000e+00> : vector<8x128xf32>
    %17 = vector.multi_reduction <add>, %16, %cst_12 [0] : vector<2x8x128xf32> to vector<8x128xf32>
    %18 = arith.addf %15, %17 : vector<8x128xf32>
    %c1_13 = arith.constant 1 : index
    %c0_14 = arith.constant 0 : index
    %c0_15 = arith.constant 0 : index
    %19 = vector.load %arg5[%c1_13, %c0_14, %c0_15] : memref<3x8x128xf32, #tpu.memory_space<vmem>>, vector<1x8x128xf32>
    %20 = vector.shape_cast %19 : vector<1x8x128xf32> to vector<8x128xf32>
    %21 = vector.shape_cast %18 : vector<8x128xf32> to vector<1x8x128xf32>
    tpu.vector_store %arg5[%c1_13, %c0_14, %c0_15], %21 {strides = array<i32>} : memref<3x8x128xf32, #tpu.memory_space<vmem>>, vector<1x8x128xf32>,
    %c2 = arith.constant 2 : index
    %c0_16 = arith.constant 0 : index
    %c0_17 = arith.constant 0 : index
    %22 = vector.load %arg5[%c2, %c0_16, %c0_17] : memref<3x8x128xf32, #tpu.memory_space<vmem>>, vector<1x8x128xf32>
    %23 = vector.shape_cast %22 : vector<1x8x128xf32> to vector<8x128xf32>
    %24 = vector.shape_cast %4 : vector<16x128xf32> to vector<2x8x128xf32>
    %cst_18 = arith.constant dense<0.000000e+00> : vector<8x128xf32>
    %25 = vector.multi_reduction <add>, %24, %cst_18 [0] : vector<2x8x128xf32> to vector<8x128xf32>
    %26 = arith.addf %23, %25 : vector<8x128xf32>
    %c2_19 = arith.constant 2 : index
    %c0_20 = arith.constant 0 : index
    %c0_21 = arith.constant 0 : index
    %27 = vector.load %arg5[%c2_19, %c0_20, %c0_21] : memref<3x8x128xf32, #tpu.memory_space<vmem>>, vector<1x8x128xf32>
    %28 = vector.shape_cast %27 : vector<1x8x128xf32> to vector<8x128xf32>
    %29 = vector.shape_cast %26 : vector<8x128xf32> to vector<1x8x128xf32>
    tpu.vector_store %arg5[%c2_19, %c0_20, %c0_21], %29 {strides = array<i32>} : memref<3x8x128xf32, #tpu.memory_space<vmem>>, vector<1x8x128xf32>,
    %c0_i32_22 = arith.constant 0 : i32
    %30 = arith.cmpi eq, %arg1, %c0_i32_22 : i32
    %31 = arith.extui %30 : i1 to i32
    %c0_i32_23 = arith.constant 0 : i32
    %32 = arith.cmpi ne, %31, %c0_i32_23 : i32
    scf.if %32 {
      %c0_24 = arith.constant 0 : index
      %c0_25 = arith.constant 0 : index
      %c0_26 = arith.constant 0 : index
      %33 = vector.load %arg5[%c0_24, %c0_25, %c0_26] : memref<3x8x128xf32, #tpu.memory_space<vmem>>, vector<3x8x128xf32>
      %c0_27 = arith.constant 0 : index
      %c0_28 = arith.constant 0 : index
      %c0_29 = arith.constant 0 : index
      %c0_30 = arith.constant 0 : index
      %34 = vector.load %arg4[%c0_27, %c0_28, %c0_29, %c0_30] : memref<1x3x8x128xf32, #tpu.memory_space<vmem>>, vector<1x3x8x128xf32>
      %35 = vector.shape_cast %34 : vector<1x3x8x128xf32> to vector<3x8x128xf32>
      %36 = vector.shape_cast %33 : vector<3x8x128xf32> to vector<1x3x8x128xf32>
      tpu.vector_store %arg4[%c0_27, %c0_28, %c0_29, %c0_30], %36 {strides = array<i32>} : memref<1x3x8x128xf32, #tpu.memory_space<vmem>>, vector<1x3x8x128xf32>,
    } else {
    }
    return
  }
  func.func @transform_0(%arg0: i32, %arg1: i32) -> (i32, i32) {
    %c1_i32 = arith.constant 1 : i32
    %0 = arith.muli %arg0, %c1_i32 : i32
    %1 = arith.addi %0, %arg1 : i32
    %c0_i32 = arith.constant 0 : i32
    %c0_i32_0 = arith.constant 0 : i32
    return %1, %c0_i32 : i32, i32
  }
  func.func @transform_1(%arg0: i32, %arg1: i32) -> (i32, i32) {
    %c1_i32 = arith.constant 1 : i32
    %0 = arith.muli %arg0, %c1_i32 : i32
    %1 = arith.addi %0, %arg1 : i32
    %c0_i32 = arith.constant 0 : i32
    %c0_i32_0 = arith.constant 0 : i32
    return %1, %c0_i32 : i32, i32
  }
  func.func @transform_2(%arg0: i32, %arg1: i32) -> (i32, i32, i32, i32) {
    %c0_i32 = arith.constant 0 : i32
    %c0_i32_0 = arith.constant 0 : i32
    %c0_i32_1 = arith.constant 0 : i32
    %c0_i32_2 = arith.constant 0 : i32
    return %arg0, %c0_i32, %c0_i32_0, %c0_i32_1 : i32, i32, i32, i32
  }
}

</mosaic_0001>

<llo_original>
// kernel: jaccard_loss.1
$region0: #{jaccard_loss.1}
  #allocation0 [shape = 'u32[]', space=smem, size = 0x4, offset = 0x4, fixed_abs, tag = 'smem constant byte address 0x4 - core index']
  #allocation1 [shape = 'u32[144,128]{1,0:T(1,128)}', space=vmem, size = 0x12000, scoped, tag = 'internal scratch']
  #allocation2 [shape = 'f32[3,8,128]{2,1,0:T(8,128)}', space=vmem, size = 0x3000, scoped, tag = 'scratch operand']
  %s0 = inlined_call_operand.vmem [shape: f32[16,128], index: 0, kind: input, shape index: {}]
  %s1 = inlined_call_operand.vmem [shape: f32[16,128], index: 1, kind: input, shape index: {}]
  %s2 = inlined_call_operand.vmem [shape: f32[1,3,8,128], index: 2, kind: output, shape index: {}]
  %s3 = sld [smem:[#allocation0]]
  $region26: #{jaccard_loss.1} parent=0
    _
  %s5 = ssub.s32 1, %s3
  %s6 = scalar_select 0, %s5, %s3
  // Predicated region
  $region2: #{jaccard_loss.1} parent=0 // pred_check
    _
  $region3: #{jaccard_loss.1} parent=0 // pred_check_branch
    %8 = sbr.rel (0) target = $region5
  $region4: #{jaccard_loss.1} parent=0 // pred_region
    %s9 = sadd.s32 0, 0
    %s10 = smul.u32 2, %s9
    %p11 = scmp.lt.s32.totalorder %s10, 1
    %s12 = scalar_select %p11, %s10, 1
    %s13 = smul.addr %s12, 8
    %s14 = scalar_lea.vmem %s0, %s13
    %s15 = sadd.s32 0, 0
    %s16 = smul.u32 2, %s15
  $region5: #{jaccard_loss.1} parent=0 // pred_fallthru
    _
  // Predicated region
  $region6: #{jaccard_loss.1} parent=0 // pred_check
    _
  $region7: #{jaccard_loss.1} parent=0 // pred_check_branch
    %18 = sbr.rel (0) target = $region9
  $region8: #{jaccard_loss.1} parent=0 // pred_region
    %s19 = sadd.s32 0, 0
    %s20 = smul.u32 2, %s19
    %p21 = scmp.lt.s32.totalorder %s20, 1
    %s22 = scalar_select %p21, %s20, 1
    %s23 = smul.addr %s22, 8
    %s24 = scalar_lea.vmem %s1, %s23
    %s25 = sadd.s32 0, 0
    %s26 = smul.u32 2, %s25
  $region9: #{jaccard_loss.1} parent=0 // pred_fallthru
    _
  %s27 = sadd.s32 0, 0
  %s28 = smul.u32 2, %s27
  %p29 = scmp.lt.s32.totalorder %s28, 1
  %s30 = scalar_select %p29, %s28, 1
  %s31 = smul.addr %s30, 8
  %s32 = scalar_lea.vmem %s0, %s31
  %s33 = sadd.s32 0, 0
  %s34 = smul.u32 2, %s33
  %p35 = scmp.lt.s32.totalorder %s34, 1
  %s36 = scalar_select %p35, %s34, 1
  %s37 = smul.addr %s36, 8
  %s38 = scalar_lea.vmem %s1, %s37
  %s39 = sadd.s32 0, 0
  %s40 = smul.u32 2, %s39
  %p41 = scmp.lt.s32.totalorder %s40, 1
  %s42 = scalar_select %p41, %s40, 1
  %s43 = smul.addr %s42, 8
  %s44 = scalar_lea.vmem %s0, %s43
  %s45 = sadd.s32 0, 0
  %s46 = smul.u32 2, %s45
  %s47 = sadd.s32 0, 0
  %s48 = smul.u32 2, %s47
  %p49 = scmp.lt.s32.totalorder %s48, 1
  %s50 = scalar_select %p49, %s48, 1
  %s51 = smul.addr %s50, 8
  %s52 = scalar_lea.vmem %s1, %s51
  %s53 = sadd.s32 0, 0
  %s54 = smul.u32 2, %s53
  %p55 = scmp.eq.s32.totalorder 0, 0
  // Predicated region
  $region10: #{jaccard_loss.1} parent=0 // pred_check
    %p56 = pneg %p55
  $region11: #{jaccard_loss.1} parent=0 // pred_check_branch
    %58 = sbr.rel (%p56) target = $region13
  $region12: #{jaccard_loss.1} parent=0 // pred_region
    %59 = vst [vmem:[#allocation2] sm:$0xff] 0.0
    %60 = vst [vmem:[#allocation2 + $0x8] sm:$0xff] 0.0
    %61 = vst [vmem:[#allocation2 + $0x10] sm:$0xff] 0.0
  $region13: #{jaccard_loss.1} parent=0 // pred_fallthru
    _
  %v62 = vld [vmem:[%s44] sm:$0xff]
  %v63 = vld [vmem:[%s44 + $0x8] sm:$0xff]
  %v64 = vld [vmem:[%s52] sm:$0xff]
  %v65 = vld [vmem:[%s52 + $0x8] sm:$0xff]
  %v66 = vld [vmem:[#allocation2] sm:$0xff]
  %v67 = vmul.f32 %v62, %v64
  %v68 = vmul.f32 %v63, %v65
  %v69 = vadd.f32 %v67, %v68
  %v70 = vadd.f32 %v66, %v69
  %71 = vst [vmem:[#allocation2] sm:$0xff] %v70
  %s72 = scalar_lea.vmem [#allocation2], 8
  %v73 = vld [vmem:[%s72] sm:$0xff]
  %v74 = vadd.f32 %v62, %v63
  %v75 = vadd.f32 %v73, %v74
  %76 = vst [vmem:[%s72] sm:$0xff] %v75
  %s77 = scalar_lea.vmem [#allocation2], 16
  %v78 = vld [vmem:[%s77] sm:$0xff]
  %v79 = vadd.f32 %v64, %v65
  %v80 = vadd.f32 %v78, %v79
  %81 = vst [vmem:[%s77] sm:$0xff] %v80
  // Predicated region
  $region14: #{jaccard_loss.1} parent=0 // pred_check
    %p82 = pneg %p55
  $region15: #{jaccard_loss.1} parent=0 // pred_check_branch
    %84 = sbr.rel (%p82) target = $region17
  $region16: #{jaccard_loss.1} parent=0 // pred_region
    %v85 = vld [vmem:[#allocation2] sm:$0xff]
    %v86 = vld [vmem:[#allocation2 + $0x8] sm:$0xff]
    %v87 = vld [vmem:[#allocation2 + $0x10] sm:$0xff]
    %88 = vst [vmem:[%s2] sm:$0xff] %v85
    %89 = vst [vmem:[%s2 + $0x8] sm:$0xff] %v86
    %90 = vst [vmem:[%s2 + $0x10] sm:$0xff] %v87
  $region17: #{jaccard_loss.1} parent=0 // pred_fallthru
    _
  // Predicated region
  $region18: #{jaccard_loss.1} parent=0 // pred_check
    _
  $region19: #{jaccard_loss.1} parent=0 // pred_check_branch
    %92 = sbr.rel (0) target = $region21
  $region20: #{jaccard_loss.1} parent=0 // pred_region
    _
  $region21: #{jaccard_loss.1} parent=0 // pred_fallthru
    _
  // Predicated region
  $region22: #{jaccard_loss.1} parent=0 // pred_check
    _
  $region23: #{jaccard_loss.1} parent=0 // pred_check_branch
    %94 = sbr.rel (0) target = $region25
  $region24: #{jaccard_loss.1} parent=0 // pred_region
    _
  $region25: #{jaccard_loss.1} parent=0 // pred_fallthru
    _

</llo_original>
